<compile_context>
chip_gen: v6e
topology: v6e:2x2x1
jax: 0.10.0
libtpu: 0.0.40
codegen_flags: <defaults>
</compile_context>

<pallas_src>
import jax
import jax.numpy as jnp
from jax import lax
from jax.experimental import pallas as pl
from jax.experimental.pallas import tpu as pltpu

LANE = 128


def _round_up(n, m):
    return (n + m - 1) // m * m


# ---------------------------------------------------------------------------
# Schedule (mirrors the PyTorch __init__ logic)
# ---------------------------------------------------------------------------
def build_schedule(dim):
    pairs = [(i, j) for i in range(dim) for j in range(i + 1, dim)]
    pair_to_idx = {p: k for k, p in enumerate(pairs)}
    schedule = []
    remaining = set(pairs)
    while remaining:
        step = []
        used = set()
        for p in list(remaining):
            i, j = p
            if i not in used and j not in used:
                step.append(p)
                used.update([i, j])
        schedule.append(step)
        remaining -= set(step)
    return schedule, pair_to_idx


def build_step_tables(dim):
    """Static (num_steps, max_p) index tables.  Steps shorter than max_p are
    padded with identity rotations (angle masked to 0) on columns unused by
    that step, so all scatter indices within a step stay distinct."""
    schedule, pair_to_idx = build_schedule(dim)
    max_p = max(len(s) for s in schedule)
    I_tab, J_tab, A_tab, M_tab = [], [], [], []
    for step in schedule:
        used = set()
        for (i, j) in step:
            used.update((i, j))
        free = [c for c in range(dim) if c not in used]
        I_row = [p[0] for p in step]
        J_row = [p[1] for p in step]
        A_row = [pair_to_idx[p] for p in step]
        M_row = [1.0] * len(step)
        fi = 0
        while len(I_row) < max_p:
            I_row.append(free[fi])
            J_row.append(free[fi + 1])
            A_row.append(0)
            M_row.append(0.0)
            fi += 2
        I_tab.append(I_row)
        J_tab.append(J_row)
        A_tab.append(A_row)
        M_tab.append(M_row)
    return (jnp.asarray(I_tab, jnp.int32), jnp.asarray(J_tab, jnp.int32),
            jnp.asarray(A_tab, jnp.int32), jnp.asarray(M_tab, jnp.float32))


def build_total_matrix(dim, angles):
    """Compose all Givens steps into one (dim, dim) f32 matrix W such that
    forward(x) == x @ W (+ bias).  lax.scan keeps the HLO size O(1) in D."""
    I_tab, J_tab, A_tab, M_tab = build_step_tables(dim)

    def body(W, tabs):
        I, J, aidx, m = tabs
        a = angles[aidx] * m          # padded entries -> angle 0 (identity)
        c, s = jnp.cos(a), jnp.sin(a)
        WI = W[:, I]
        WJ = W[:, J]
        W = W.at[:, I].set(c * WI - s * WJ)
        W = W.at[:, J].set(s * WI + c * WJ)
        return W, None

    W0 = jnp.eye(dim, dtype=jnp.float32)
    W, _ = lax.scan(body, W0, (I_tab, J_tab, A_tab, M_tab))
    return W


# ---------------------------------------------------------------------------
# Pallas kernel: lane-dense (TILE_B, D_pad) @ (D_pad, D_pad) + bias
# ---------------------------------------------------------------------------
def givens_kernel(x_ref, w_ref, b_ref, o_ref):
    # bf16 cast on the VPU (hidden under the MXU); f32 accumulation on the MXU.
    x_bf16 = x_ref[...].astype(jnp.bfloat16)
    acc = jnp.dot(x_bf16, w_ref[...], preferred_element_type=jnp.float32)
    o_ref[...] = (acc + b_ref[...]).astype(o_ref.dtype)


def _choose_tile_b(B):
    """Multiple of 8, <= 256 rows, and >= 2 tiles whenever B >= 16 so the
    'parallel' batch axis can shard across v7x's two TensorCores."""
    if B <= 8:
        return 8
    half = _round_up(B, 8) // 2
    return max(8, min(256, (half // 8) * 8))


def givens_linear_parallel(x, angles, bias):
    """x: (B, D), angles: (D*(D-1)//2,) f32, bias: (D,) f32."""
    B, D = x.shape
    W = build_total_matrix(D, angles)                       # (D, D) f32

    D_pad = max(_round_up(D, LANE), LANE)                   # lane-dense output
    TILE_B = _choose_tile_b(B)
    B_pad = _round_up(B, TILE_B)                            # no ragged tail tile

    x_p = x.astype(jnp.float32)
    if (B_pad, D_pad) != (B, D):
        x_p = jnp.pad(x_p, ((0, B_pad - B), (0, D_pad - D)))
    W_p = W if D_pad == D else jnp.pad(W, ((0, D_pad - D), (0, D_pad - D)))
    W_bf16 = W_p.astype(jnp.bfloat16)                       # halves VMEM/HBM traffic
    b_p = bias.astype(jnp.float32)
    if D_pad != D:
        b_p = jnp.pad(b_p, (0, D_pad - D))
    b2d = b_p.reshape(1, D_pad)

    grid = (B_pad // TILE_B,)
    out_itemsize = jnp.dtype(x.dtype).itemsize

    # VMEM budget (sized for the worst case of double-buffered W as well):
    #   x tile (2 bufs, f32) + out tile (2 bufs) + W (<=2 bufs bf16) + bias.
    needed = (2 * TILE_B * D_pad * 4
              + 2 * TILE_B * D_pad * out_itemsize
              + 2 * D_pad * D_pad * 2
              + 2 * 8 * D_pad * 4)
    vmem_limit = int(min(max(needed + (4 << 20), 16 << 20), 128 << 20))

    def _run(single_buffer_resident):
        resident_kw = (dict(pipeline_mode=pl.Buffered(1))
                       if single_buffer_resident else {})
        in_specs = [
            pl.BlockSpec((TILE_B, D_pad), lambda i: (i, 0)),               # x tile
            pl.BlockSpec((D_pad, D_pad), lambda i: (0, 0), **resident_kw),  # W
            pl.BlockSpec((1, D_pad), lambda i: (0, 0), **resident_kw),      # bias
        ]
        out_spec = pl.BlockSpec((TILE_B, D_pad), lambda i: (i, 0))
        return pl.pallas_call(
            givens_kernel,
            out_shape=jax.ShapeDtypeStruct((B_pad, D_pad), x.dtype),
            grid_spec=pltpu.PrefetchScalarGridSpec(
                num_scalar_prefetch=0,
                grid=grid,
                in_specs=in_specs,
                out_specs=out_spec,
            ),
            compiler_params=pltpu.CompilerParams(
                dimension_semantics=("parallel",),
                vmem_limit_bytes=vmem_limit,
            ),
        )(x_p, W_bf16, b2d)

    try:
        out_p = jax.block_until_ready(_run(True))
    except Exception:
        # Fallback for Pallas builds that reject single-buffered resident
        # blocks; default double-buffering is semantically identical.
        out_p = _run(False)

    return out_p[:B, :D]


# ---------------------------------------------------------------------------
# Pure-JAX reference replicating the PyTorch per-pair update semantics
# ---------------------------------------------------------------------------
def givens_reference(x, angles, bias):
    B, D = x.shape
    schedule, pair_to_idx = build_schedule(D)
    x = x.astype(jnp.float32)
    for step in schedule:
        I = jnp.asarray([p[0] for p in step], dtype=jnp.int32)
        J = jnp.asarray([p[1] for p in step], dtype=jnp.int32)
        aidx = jnp.asarray([pair_to_idx[p] for p in step], dtype=jnp.int32)
        a = angles[aidx]
        c, s = jnp.cos(a), jnp.sin(a)
        xI = x[:, I]
        xJ = x[:, J]
        x = x.at[:, I].set(c * xI - s * xJ)
        x = x.at[:, J].set(s * xI + c * xJ)
    return x + bias[None, :]


if __name__ == "__main__":
    B, D = 32, 16
    key = jax.random.PRNGKey(0)
    kx, ka, kb = jax.random.split(key, 3)
    x = jax.random.normal(kx, (B, D), dtype=jnp.float32)
    # nn.Parameter init is zeros; use small non-trivial angles/bias so the
    # rotations actually do something.
    angles = 0.1 * jax.random.normal(ka, (D * (D - 1) // 2,), dtype=jnp.float32)
    bias = 0.1 * jax.random.normal(kb, (D,), dtype=jnp.float32)

    out = givens_linear_parallel(x, angles, bias)
    out = jax.block_until_ready(out)

    ref = givens_reference(x, angles, bias)
    err = float(jnp.max(jnp.abs(out - ref)))
    # bf16 MXU matmul with f32 accumulation vs. f32 sequential reference:
    # ~1e-3 relative error expected; 5e-2 absolute is a comfortable bound here.
    assert err < 5e-2, f"max abs err {err}"
    print("KERNEL_OK")
</pallas_src>

<mosaic_0001>
module attributes {stable_mosaic.version = 11 : i64} {
  func.func @givens_kernel(%arg0: i32, %arg1: memref<16x128xf32, #tpu.memory_space<vmem>>, %arg2: memref<128x128xbf16, #tpu.memory_space<vmem>>, %arg3: memref<1x128xf32, #tpu.memory_space<vmem>>, %arg4: memref<16x128xf32, #tpu.memory_space<vmem>>) attributes {dimension_semantics = [#tpu.dimension_semantics<parallel>], iteration_bounds = array<i64: 2>, scalar_prefetch = 0 : i64, scratch_operands = 0 : i64, tpu.core_type = #tpu.core_type<tc>, window_params = [{transform_indices = @transform_0, window_bounds = array<i64: 16, 128>}, {pipeline_mode = #tpu.pipeline_mode<synchronous>, transform_indices = @transform_1, window_bounds = array<i64: 128, 128>}, {pipeline_mode = #tpu.pipeline_mode<synchronous>, transform_indices = @transform_2, window_bounds = array<i64: 1, 128>}, {transform_indices = @transform_3, window_bounds = array<i64: 16, 128>}]} {
    %c0 = arith.constant 0 : index
    %c0_0 = arith.constant 0 : index
    %0 = vector.load %arg1[%c0, %c0_0] : memref<16x128xf32, #tpu.memory_space<vmem>>, vector<16x128xf32>
    %1 = arith.truncf %0 : vector<16x128xf32> to vector<16x128xbf16>
    %c0_1 = arith.constant 0 : index
    %c0_2 = arith.constant 0 : index
    %2 = vector.load %arg2[%c0_1, %c0_2] : memref<128x128xbf16, #tpu.memory_space<vmem>>, vector<128x128xbf16>
    %cst = arith.constant dense<0.000000e+00> : vector<16x128xf32>
    %3 = tpu.matmul %1, %2, %cst {dimension_numbers = #tpu.dot_dimension_numbers<[1], [0], [0], [1], [0, 0, 1, 1], [], []>} : vector<16x128xbf16>, vector<128x128xbf16>, vector<16x128xf32> -> vector<16x128xf32>
    %c0_3 = arith.constant 0 : index
    %c0_4 = arith.constant 0 : index
    %4 = vector.load %arg3[%c0_3, %c0_4] : memref<1x128xf32, #tpu.memory_space<vmem>>, vector<1x128xf32>
    %5 = vector.broadcast %4 : vector<1x128xf32> to vector<16x128xf32>
    %6 = arith.addf %3, %5 : vector<16x128xf32>
    %c0_5 = arith.constant 0 : index
    %c0_6 = arith.constant 0 : index
    %7 = vector.load %arg4[%c0_5, %c0_6] : memref<16x128xf32, #tpu.memory_space<vmem>>, vector<16x128xf32>
    tpu.vector_store %arg4[%c0_5, %c0_6], %6 {strides = array<i32>} : memref<16x128xf32, #tpu.memory_space<vmem>>, vector<16x128xf32>,
    return
  }
  func.func @transform_0(%arg0: i32) -> (i32, i32) {
    %c0_i32 = arith.constant 0 : i32
    %c0_i32_0 = arith.constant 0 : i32
    return %arg0, %c0_i32 : i32, i32
  }
  func.func @transform_1(%arg0: i32) -> (i32, i32) {
    %c0_i32 = arith.constant 0 : i32
    %c0_i32_0 = arith.constant 0 : i32
    %c0_i32_1 = arith.constant 0 : i32
    return %c0_i32, %c0_i32_0 : i32, i32
  }
  func.func @transform_2(%arg0: i32) -> (i32, i32) {
    %c0_i32 = arith.constant 0 : i32
    %c0_i32_0 = arith.constant 0 : i32
    %c0_i32_1 = arith.constant 0 : i32
    return %c0_i32, %c0_i32_0 : i32, i32
  }
  func.func @transform_3(%arg0: i32) -> (i32, i32) {
    %c0_i32 = arith.constant 0 : i32
    %c0_i32_0 = arith.constant 0 : i32
    return %arg0, %c0_i32 : i32, i32
  }
}

module attributes {stable_mosaic.version = 11 : i64} {
  func.func @givens_kernel(%arg0: i32, %arg1: memref<16x128xf32, #tpu.memory_space<vmem>>, %arg2: memref<128x128xbf16, #tpu.memory_space<vmem>>, %arg3: memref<1x128xf32, #tpu.memory_space<vmem>>, %arg4: memref<16x128xf32, #tpu.memory_space<vmem>>) attributes {dimension_semantics = [#tpu.dimension_semantics<parallel>], iteration_bounds = array<i64: 2>, scalar_prefetch = 0 : i64, scratch_operands = 0 : i64, tpu.core_type = #tpu.core_type<tc>, window_params = [{transform_indices = @transform_0, window_bounds = array<i64: 16, 128>}, {pipeline_mode = #tpu.pipeline_mode<synchronous>, transform_indices = @transform_1, window_bounds = array<i64: 128, 128>}, {pipeline_mode = #tpu.pipeline_mode<synchronous>, transform_indices = @transform_2, window_bounds = array<i64: 1, 128>}, {transform_indices = @transform_3, window_bounds = array<i64: 16, 128>}]} {
    %c0 = arith.constant 0 : index
    %c0_0 = arith.constant 0 : index
    %0 = vector.load %arg1[%c0, %c0_0] : memref<16x128xf32, #tpu.memory_space<vmem>>, vector<16x128xf32>
    %1 = arith.truncf %0 : vector<16x128xf32> to vector<16x128xbf16>
    %c0_1 = arith.constant 0 : index
    %c0_2 = arith.constant 0 : index
    %2 = vector.load %arg2[%c0_1, %c0_2] : memref<128x128xbf16, #tpu.memory_space<vmem>>, vector<128x128xbf16>
    %cst = arith.constant dense<0.000000e+00> : vector<16x128xf32>
    %3 = tpu.matmul %1, %2, %cst {dimension_numbers = #tpu.dot_dimension_numbers<[1], [0], [0], [1], [0, 0, 1, 1], [], []>} : vector<16x128xbf16>, vector<128x128xbf16>, vector<16x128xf32> -> vector<16x128xf32>
    %c0_3 = arith.constant 0 : index
    %c0_4 = arith.constant 0 : index
    %4 = vector.load %arg3[%c0_3, %c0_4] : memref<1x128xf32, #tpu.memory_space<vmem>>, vector<1x128xf32>
    %5 = vector.broadcast %4 : vector<1x128xf32> to vector<16x128xf32>
    %6 = arith.addf %3, %5 : vector<16x128xf32>
    %c0_5 = arith.constant 0 : index
    %c0_6 = arith.constant 0 : index
    %7 = vector.load %arg4[%c0_5, %c0_6] : memref<16x128xf32, #tpu.memory_space<vmem>>, vector<16x128xf32>
    tpu.vector_store %arg4[%c0_5, %c0_6], %6 {strides = array<i32>} : memref<16x128xf32, #tpu.memory_space<vmem>>, vector<16x128xf32>,
    return
  }
  func.func @transform_0(%arg0: i32) -> (i32, i32) {
    %c0_i32 = arith.constant 0 : i32
    %c0_i32_0 = arith.constant 0 : i32
    return %arg0, %c0_i32 : i32, i32
  }
  func.func @transform_1(%arg0: i32) -> (i32, i32) {
    %c0_i32 = arith.constant 0 : i32
    %c0_i32_0 = arith.constant 0 : i32
    %c0_i32_1 = arith.constant 0 : i32
    return %c0_i32, %c0_i32_0 : i32, i32
  }
  func.func @transform_2(%arg0: i32) -> (i32, i32) {
    %c0_i32 = arith.constant 0 : i32
    %c0_i32_0 = arith.constant 0 : i32
    %c0_i32_1 = arith.constant 0 : i32
    return %c0_i32, %c0_i32_0 : i32, i32
  }
  func.func @transform_3(%arg0: i32) -> (i32, i32) {
    %c0_i32 = arith.constant 0 : i32
    %c0_i32_0 = arith.constant 0 : i32
    return %arg0, %c0_i32 : i32, i32
  }
}

</mosaic_0001>

<llo_original>
// kernel: tpu_custom_call.1
$region0: #{tpu_custom_call.1}
  #allocation0 [shape = 'u32[]', space=smem, size = 0x4, offset = 0x4, fixed_abs, tag = 'smem constant byte address 0x4 - core index']
  #allocation1 [shape = 'u32[144,128]{1,0:T(1,128)}', space=vmem, size = 0x12000, scoped, tag = 'internal scratch']
  %s0 = inlined_call_operand.hbm [shape: f32[32,128], index: 0, kind: input, shape index: {}]
  %s1 = inlined_call_operand.hbm [shape: bf16[128,128], index: 1, kind: input, shape index: {}]
  %s2 = inlined_call_operand.vmem [shape: f32[1,128], index: 2, kind: input, shape index: {}]
  %s3 = inlined_call_operand.hbm [shape: f32[32,128], index: 3, kind: output, shape index: {}]
  %s4 = sld [smem:[#allocation0]]
  $region53: #{tpu_custom_call.1} parent=0
    _
  %s6 = ssub.s32 1, %s4
  %s7 = scalar_select 0, %s6, %s4
  $region1: #{tpu_custom_call.1} parent=0
    #allocation2 [shape = 'u8[16384]{0}', space=vmem, size = 0x4000, scoped, tag = 'input window, operand 0']
    #allocation3 [shape = 's32[2]{0}', space=sflag, size = 0x8, scoped, tag = 'scoped memory for tpu_custom_call.1']
    #allocation4 [shape = 's32[2]{0}', space=sflag, size = 0x8, scoped, tag = 'scoped memory for tpu_custom_call.1']
    #allocation5 [shape = 'u8[32768]{0}', space=vmem, size = 0x8000, scoped, tag = 'input window, operand 1, single buffered']
    #allocation6 [shape = 's32[1]{0}', space=sflag, size = 0x4, scoped, tag = 'scoped memory for tpu_custom_call.1']
    #allocation7 [shape = 'u8[16384]{0}', space=vmem, size = 0x4000, scoped, tag = 'output window, operand 0']
    %8 = vsyncpa [#allocation3], 0
    %s9 = scalar_lea.sflag [#allocation3], 1
    %10 = vsyncpa %s9, 0
    %11 = vsyncpa [#allocation6], 0
    %12 = vsyncpa [#allocation4], 0
    %s13 = scalar_lea.sflag [#allocation4], 1
    %14 = vsyncpa %s13, 0
    loop: start=0, step=1, limit=4
    $region2: #{tpu_custom_call.1} parent=1 // loop_pre_header
      _
    $region3: #{tpu_custom_call.1} parent=1 // loop_header
      %s16 = sphi 0, %s20
      %p17 = scmp.ge.s32.totalorder %s16, 4
      %s26 = sphi 0, %s28
      %s29 = sphi 0, %s26
      %s30 = sphi 0, %s29
      %s46 = sphi 0, %s30
      %s50 = sphi 0, %s50
      %s52 = sphi 0, %s50
      %s53 = sphi 0, %s52
      %s67 = sphi 0, %s53
      %s71 = sphi 0, %s71
      %s73 = sphi 0, %s71
      %s74 = sphi 0, %s73
      %s88 = sphi 0, %s74
      %s94 = sphi 0, %s96
      %s97 = sphi 0, %s94
      %s98 = sphi 0, %s97
      %s114 = sphi 0, %s98
    $region4: #{tpu_custom_call.1} parent=1 // loop_header_branch
      %19 = sbr.rel (%p17) target = $region8
    $region5: #{tpu_custom_call.1} parent=1 // loop_body
      %s21 = ssub.s32 %s16, 1
      %s22 = ssub.s32 %s16, 2
      %s23 = sadd.s32 %s16, 1
      %s24 = ssub.s32 %s16, %s23
      %p25 = scmp.eq.s32.totalorder %s24, 0
      %s27 = sadd.s32 %s26, 1
      %s28 = scalar_select %p25, %s26, %s27
      %p31 = pneg %p25
      %p32 = scmp.eq.s32.totalorder %s16, 1
      %p33 = por %p31, %p32
      %p34 = scmp.ne.s32.totalorder %s26, %s29
      %p35 = scmp.eq.s32.totalorder %s16, 0
      %p36 = por %p34, %p35
      %p37 = scmp.ne.s32.totalorder %s26, %s29
      %p38 = scmp.eq.s32.totalorder %s21, 1
      %p39 = por %p37, %p38
      %p40 = scmp.ne.s32.totalorder %s29, %s30
      %p41 = scmp.eq.s32.totalorder %s21, 0
      %p42 = por %p40, %p41
      %p43 = scmp.ne.s32.totalorder %s29, %s30
      %p44 = scmp.eq.s32.totalorder %s22, 1
      %p45 = por %p43, %p44
      %p47 = scmp.ne.s32.totalorder %s30, %s46
      %p48 = scmp.eq.s32.totalorder %s22, 0
      %p49 = por %p47, %p48
      %s51 = sadd.s32 %s50, 1
      %p54 = scmp.eq.s32.totalorder %s16, 1
      %p55 = scmp.ne.s32.totalorder %s50, %s52
      %p56 = scmp.eq.s32.totalorder %s16, 0
      %p57 = por %p55, %p56
      %p58 = scmp.ne.s32.totalorder %s50, %s52
      %p59 = scmp.eq.s32.totalorder %s21, 1
      %p60 = por %p58, %p59
      %p61 = scmp.ne.s32.totalorder %s52, %s53
      %p62 = scmp.eq.s32.totalorder %s21, 0
      %p63 = por %p61, %p62
      %p64 = scmp.ne.s32.totalorder %s52, %s53
      %p65 = scmp.eq.s32.totalorder %s22, 1
      %p66 = por %p64, %p65
      %p68 = scmp.ne.s32.totalorder %s53, %s67
      %p69 = scmp.eq.s32.totalorder %s22, 0
      %p70 = por %p68, %p69
      %s72 = sadd.s32 %s71, 1
      %p75 = scmp.eq.s32.totalorder %s16, 1
      %p76 = scmp.ne.s32.totalorder %s71, %s73
      %p77 = scmp.eq.s32.totalorder %s16, 0
      %p78 = por %p76, %p77
      %p79 = scmp.ne.s32.totalorder %s71, %s73
      %p80 = scmp.eq.s32.totalorder %s21, 1
      %p81 = por %p79, %p80
      %p82 = scmp.ne.s32.totalorder %s73, %s74
      %p83 = scmp.eq.s32.totalorder %s21, 0
      %p84 = por %p82, %p83
      %p85 = scmp.ne.s32.totalorder %s73, %s74
      %p86 = scmp.eq.s32.totalorder %s22, 1
      %p87 = por %p85, %p86
      %p89 = scmp.ne.s32.totalorder %s74, %s88
      %p90 = scmp.eq.s32.totalorder %s22, 0
      %p91 = por %p89, %p90
      %s92 = ssub.s32 %s16, %s23
      %p93 = scmp.eq.s32.totalorder %s92, 0
      %s95 = sadd.s32 %s94, 1
      %s96 = scalar_select %p93, %s94, %s95
      %p99 = pneg %p93
      %p100 = scmp.eq.s32.totalorder %s16, 1
      %p101 = por %p99, %p100
      %p102 = scmp.ne.s32.totalorder %s94, %s97
      %p103 = scmp.eq.s32.totalorder %s16, 0
      %p104 = por %p102, %p103
      %p105 = scmp.ne.s32.totalorder %s94, %s97
      %p106 = scmp.eq.s32.totalorder %s21, 1
      %p107 = por %p105, %p106
      %p108 = scmp.ne.s32.totalorder %s97, %s98
      %p109 = scmp.eq.s32.totalorder %s21, 0
      %p110 = por %p108, %p109
      %p111 = scmp.ne.s32.totalorder %s97, %s98
      %p112 = scmp.eq.s32.totalorder %s22, 1
      %p113 = por %p111, %p112
      %p115 = scmp.ne.s32.totalorder %s98, %s114
      %p116 = scmp.eq.s32.totalorder %s22, 0
      %p117 = por %p115, %p116
      %p118 = scmp.le.s32.totalorder 1, %s16
      %p119 = scmp.lt.s32.totalorder %s16, 3
      %p120 = pnand %p118, %p119
      %p121 = pneg %p120
      // Predicated region
      $region9: #{tpu_custom_call.1} parent=5 // pred_check
        _
      $region10: #{tpu_custom_call.1} parent=5 // pred_check_branch
        %123 = sbr.rel (%p120) target = $region12
      $region11: #{tpu_custom_call.1} parent=5 // pred_region
        %s124 = ssub.s32 %s16, 1
        // Predicated region
        $region13: #{tpu_custom_call.1} parent=11 // pred_check
          %p125 = pneg %p63
        $region14: #{tpu_custom_call.1} parent=11 // pred_check_branch
          %127 = sbr.rel (%p125) target = $region16
        $region15: #{tpu_custom_call.1} parent=11 // pred_region
          %s129 = ssub.s32 1024, 1024
          %130 = vsyncadd [#allocation6], %s129
          %s131 = sshll.u32 [#allocation5], 4
          %s132 = int_to_ptr.vmem [resolvable:$true] %s131
          %137 = dma.hbm_to_vmem [thread:$0]  %s1, 1024, %s132, [#allocation6], 64, 64, 4
        $region16: #{tpu_custom_call.1} parent=11 // pred_fallthru
          _
        // Predicated region
        $region17: #{tpu_custom_call.1} parent=11 // pred_check
          %p138 = pneg %p84
        $region18: #{tpu_custom_call.1} parent=11 // pred_check_branch
          %140 = sbr.rel (%p138) target = $region20
        $region19: #{tpu_custom_call.1} parent=11 // pred_region
          _
        $region20: #{tpu_custom_call.1} parent=11 // pred_fallthru
          _
      $region12: #{tpu_custom_call.1} parent=5 // pred_fallthru
        _
      %p141 = scmp.lt.s32.totalorder %s16, 2
      // Predicated region
      $region21: #{tpu_custom_call.1} parent=5 // pred_check
        %p142 = pneg %p141
      $region22: #{tpu_custom_call.1} parent=5 // pred_check_branch
        %144 = sbr.rel (%p142) target = $region24
      $region23: #{tpu_custom_call.1} parent=5 // pred_region
        // Predicated region
        $region25: #{tpu_custom_call.1} parent=23 // pred_check
          %p145 = pneg %p36
        $region26: #{tpu_custom_call.1} parent=23 // pred_check_branch
          %147 = sbr.rel (%p145) target = $region28
        $region27: #{tpu_custom_call.1} parent=23 // pred_region
          %s148 = sand.u32 %s26, 1
          %s149 = scalar_lea.sflag [#allocation3], %s148
          %s150 = sand.u32 %s26, 1
          %s151 = smul.addr %s150, 16
          %s152 = scalar_lea.vmem [#allocation2], %s151
          %s153 = smul.u32 2, %s16
          %s155 = ssub.s32 256, 256
          %156 = vsyncadd %s149, %s155
          %s157 = smul.addr %s153, 128
          %s158 = scalar_lea.hbm %s0, %s157
          %s159 = sshll.u32 %s152, 4
          %s160 = int_to_ptr.vmem [resolvable:$true] %s159
          %165 = dma.hbm_to_vmem [thread:$0]  %s158, 256, %s160, %s149, 128, 128, 8
        $region28: #{tpu_custom_call.1} parent=23 // pred_fallthru
          _
      $region24: #{tpu_custom_call.1} parent=5 // pred_fallthru
        _
      %p166 = scmp.le.s32.totalorder 1, %s16
      %p167 = scmp.lt.s32.totalorder %s16, 3
      %p168 = pnand %p166, %p167
      %p169 = pneg %p168
      // Predicated region
      $region29: #{tpu_custom_call.1} parent=5 // pred_check
        _
      $region30: #{tpu_custom_call.1} parent=5 // pred_check_branch
        %171 = sbr.rel (%p168) target = $region32
      $region31: #{tpu_custom_call.1} parent=5 // pred_region
        %s172 = ssub.s32 %s16, 1
        %s173 = sand.u32 %s29, 1
        %s174 = scalar_lea.sflag [#allocation3], %s173
        %s175 = sand.u32 %s29, 1
        %s176 = smul.addr %s175, 16
        %s177 = scalar_lea.vmem [#allocation2], %s176
        // Predicated region
        $region33: #{tpu_custom_call.1} parent=31 // pred_check
          %p178 = pneg %p42
        $region34: #{tpu_custom_call.1} parent=31 // pred_check_branch
          %180 = sbr.rel (%p178) target = $region36
        $region35: #{tpu_custom_call.1} parent=31 // pred_region
          %181 = dma.done %s174, 256
        $region36: #{tpu_custom_call.1} parent=31 // pred_fallthru
          _
        // Predicated region
        $region37: #{tpu_custom_call.1} parent=31 // pred_check
          %p182 = pneg %p63
        $region38: #{tpu_custom_call.1} parent=31 // pred_check_branch
          %184 = sbr.rel (%p182) target = $region40
        $region39: #{tpu_custom_call.1} parent=31 // pred_region
          %185 = dma.done [#allocation6], 1024
        $region40: #{tpu_custom_call.1} parent=31 // pred_fallthru
          _
        %s186 = sand.u32 %s29, 1
        %s187 = scalar_lea.sflag [#allocation3], %s186
        %s188 = sand.u32 %s29, 1
        %s189 = smul.addr %s188, 16
        %s190 = scalar_lea.vmem [#allocation2], %s189
        %p191 = pneg %p42
        %p192 = pneg %p39
        %p193 = pneg %p63
        %p194 = pneg %p60
        %p195 = pneg %p84
        %p196 = pneg %p81
        %p197 = pneg %p110
        %p198 = pneg %p107
        %s199 = sand.u32 %s97, 1
        %s200 = scalar_lea.sflag [#allocation4], %s199
        %s201 = sand.u32 %s97, 1
        %s202 = smul.addr %s201, 16
        %s203 = scalar_lea.vmem [#allocation7], %s202
        %s204 = smul.u32 2, %s21
        %s205 = smul.u32 2, %s21
        %v207 = vld [vmem:[%s177] sm:$0xff]
        %v208 = vld [vmem:[%s177 + $0x8] sm:$0xff]
        %v209 = vpack.c.bf16 %v208, %v207
        %v210 = vld [vmem:[#allocation5] sm:$0xf]
        %v211 = vld [vmem:[#allocation5 + $0x4] sm:$0xf]
        %v212 = vld [vmem:[#allocation5 + $0x8] sm:$0xf]
        %v213 = vld [vmem:[#allocation5 + $0xc] sm:$0xf]
        %v214 = vld [vmem:[#allocation5 + $0x10] sm:$0xf]
        %v215 = vld [vmem:[#allocation5 + $0x14] sm:$0xf]
        %v216 = vld [vmem:[#allocation5 + $0x18] sm:$0xf]
        %v217 = vld [vmem:[#allocation5 + $0x1c] sm:$0xf]
        %v218 = vld [vmem:[#allocation5 + $0x20] sm:$0xf]
        %v219 = vld [vmem:[#allocation5 + $0x24] sm:$0xf]
        %v220 = vld [vmem:[#allocation5 + $0x28] sm:$0xf]
        %v221 = vld [vmem:[#allocation5 + $0x2c] sm:$0xf]
        %v222 = vld [vmem:[#allocation5 + $0x30] sm:$0xf]
        %v223 = vld [vmem:[#allocation5 + $0x34] sm:$0xf]
        %v224 = vld [vmem:[#allocation5 + $0x38] sm:$0xf]
        %v225 = vld [vmem:[#allocation5 + $0x3c] sm:$0xf]
        %v226 = vld [vmem:[%s2] sm:$0x1]
        %v228 = vlaneseq
        %v229 = vshrl.u32 %v228, 7
        %v230 = vsub.s32 0, %v229
        %v231 = vrot.slane %v226, %v230
        %v249 = vunpack.c.l.b16 %v210
        %v250 = vunpack.c.l.b16 %v211
        %v251 = vunpack.c.l.b16 %v212
        %v252 = vunpack.c.l.b16 %v213
        %v253 = vunpack.c.l.b16 %v214
        %v254 = vunpack.c.l.b16 %v215
        %v255 = vunpack.c.l.b16 %v216
        %v256 = vunpack.c.l.b16 %v217
        %v257 = vunpack.c.l.b16 %v218
        %v258 = vunpack.c.l.b16 %v219
        %v259 = vunpack.c.l.b16 %v220
        %v260 = vunpack.c.l.b16 %v221
        %v261 = vunpack.c.l.b16 %v222
        %v262 = vunpack.c.l.b16 %v223
        %v263 = vunpack.c.l.b16 %v224
        %v264 = vunpack.c.l.b16 %v225
        %v265 = vpack.c.b16 %v250, %v249
        %v266 = vpack.c.b16 %v252, %v251
        %v267 = vpack.c.b16 %v254, %v253
        %v268 = vpack.c.b16 %v256, %v255
        %v269 = vpack.c.b16 %v258, %v257
        %v270 = vpack.c.b16 %v260, %v259
        %v271 = vpack.c.b16 %v262, %v261
        %v272 = vpack.c.b16 %v264, %v263
        %281 = vmatprep.subr.bf16.mxu0 0
        %282 = vmatpush1.bf16.msra.mxu0 %v272
        %283 = vmatprep.subr.bf16.mxu0 0
        %284 = vmatpush1.bf16.msra.mxu0 %v271
        %285 = vmatprep.subr.bf16.mxu0 0
        %286 = vmatpush1.bf16.msra.mxu0 %v270
        %287 = vmatprep.subr.bf16.mxu0 0
        %288 = vmatpush1.bf16.msra.mxu0 %v269
        %289 = vmatprep.subr.bf16.mxu0 0
        %290 = vmatpush1.bf16.msra.mxu0 %v268
        %291 = vmatprep.subr.bf16.mxu0 0
        %292 = vmatpush1.bf16.msra.mxu0 %v267
        %293 = vmatprep.subr.bf16.mxu0 0
        %294 = vmatpush1.bf16.msra.mxu0 %v266
        %295 = vmatprep.subr.bf16.mxu0 0
        %296 = vmatpush1.bf16.msra.mxu0 %v265
        %297 = vmatprep.subr.bf16.mxu0 0
        %298 = vmatpush2.bf16.msra.mxu0 0
        %299 = vmatprep.subr.bf16.mxu0 0
        %300 = vmatpush2.bf16.msra.mxu0 0
        %301 = vmatprep.subr.bf16.mxu0 0
        %302 = vmatpush2.bf16.msra.mxu0 0
        %303 = vmatprep.subr.bf16.mxu0 0
        %304 = vmatpush2.bf16.msra.mxu0 0
        %305 = vmatprep.subr.bf16.mxu0 0
        %306 = vmatpush2.bf16.msra.mxu0 0
        %307 = vmatprep.subr.bf16.mxu0 0
        %308 = vmatpush2.bf16.msra.mxu0 0
        %309 = vmatprep.subr.bf16.mxu0 0
        %310 = vmatpush2.bf16.msra.mxu0 0
        %311 = vmatprep.subr.bf16.mxu0 0
        %312 = vmatpush2.bf16.msra.mxu0 0
        %313 = vmatprep.mubr.bf16.mxu0 0
        %314 = vmatmul.mubr.bf16.gmra.mxu0 %v209
        %v315 = vpop.f32.mrf.mxu0
        %v316 = vadd.f32 %v231, %v315
        %v317 = vpop.f32.mrf.mxu0
        %v318 = vpop.f32.mrf.mxu0
        %v319 = vadd.f32 %v231, %v318
        %v320 = vpop.f32.mrf.mxu0
        %321 = vdwg.mxu0
        %322 = vst [vmem:[%s203] sm:$0xff] %v316
        %323 = vst [vmem:[%s203 + $0x8] sm:$0xff] %v319
        %s324 = sand.u32 %s97, 1
        %s325 = scalar_lea.sflag [#allocation4], %s324
        %s326 = sand.u32 %s97, 1
        %s327 = smul.addr %s326, 16
        %s328 = scalar_lea.vmem [#allocation7], %s327
        // Predicated region
        $region41: #{tpu_custom_call.1} parent=31 // pred_check
          %p329 = pneg %p107
        $region42: #{tpu_custom_call.1} parent=31 // pred_check_branch
          %331 = sbr.rel (%p329) target = $region44
        $region43: #{tpu_custom_call.1} parent=31 // pred_region
          %s332 = smul.u32 2, %s21
          %s334 = ssub.s32 256, 256
          %335 = vsyncadd %s325, %s334
          %s336 = smul.addr %s332, 128
          %s337 = scalar_lea.hbm %s3, %s336
          %s338 = sshll.u32 %s328, 4
          %s339 = int_to_ptr.vmem [resolvable:$true] %s338
          %344 = dma.vmem_to_hbm [thread:$0]  %s339, 256, %s337, %s325, 128, 128, 8
        $region44: #{tpu_custom_call.1} parent=31 // pred_fallthru
          _
      $region32: #{tpu_custom_call.1} parent=5 // pred_fallthru
        _
      %p345 = scmp.le.s32.totalorder 2, %s16
      // Predicated region
      $region45: #{tpu_custom_call.1} parent=5 // pred_check
        %p346 = pneg %p345
      $region46: #{tpu_custom_call.1} parent=5 // pred_check_branch
        %348 = sbr.rel (%p346) target = $region48
      $region47: #{tpu_custom_call.1} parent=5 // pred_region
        %s349 = ssub.s32 %s16, 2
        // Predicated region
        $region49: #{tpu_custom_call.1} parent=47 // pred_check
          %p350 = pneg %p113
        $region50: #{tpu_custom_call.1} parent=47 // pred_check_branch
          %352 = sbr.rel (%p350) target = $region52
        $region51: #{tpu_custom_call.1} parent=47 // pred_region
          %s353 = sand.u32 %s98, 1
          %s354 = scalar_lea.sflag [#allocation4], %s353
          %s355 = sand.u32 %s98, 1
          %s356 = smul.addr %s355, 16
          %s357 = scalar_lea.vmem [#allocation7], %s356
          %358 = dma.done %s354, 256
        $region52: #{tpu_custom_call.1} parent=47 // pred_fallthru
          _
      $region48: #{tpu_custom_call.1} parent=5 // pred_fallthru
        _
    $region6: #{tpu_custom_call.1} parent=1 // loop_footer
      %s20 = sadd.s32 1, %s16
    $region7: #{tpu_custom_call.1} parent=1 // loop_footer_branch
      %15 = sbr.rel target = $region3
    $region8: #{tpu_custom_call.1} parent=1 // loop_exit
      _
    %359 = vsyncpa [#allocation3], 1
    %s360 = scalar_lea.sflag [#allocation3], 1
    %361 = vsyncpa %s360, 1
    %362 = vsyncpa [#allocation6], 1
    %363 = vsyncpa [#allocation4], 1
    %s364 = scalar_lea.sflag [#allocation4], 1
    %365 = vsyncpa %s364, 1

// kernel: tpu_custom_call.1
$region0: #{tpu_custom_call.1}
  #allocation0 [shape = 'u32[]', space=smem, size = 0x4, offset = 0x4, fixed_abs, tag = 'smem constant byte address 0x4 - core index']
  #allocation1 [shape = 'u32[144,128]{1,0:T(1,128)}', space=vmem, size = 0x12000, scoped, tag = 'internal scratch']
  %s0 = inlined_call_operand.hbm [shape: f32[32,128], index: 0, kind: input, shape index: {}]
  %s1 = inlined_call_operand.hbm [shape: bf16[128,128], index: 1, kind: input, shape index: {}]
  %s2 = inlined_call_operand.vmem [shape: f32[1,128], index: 2, kind: input, shape index: {}]
  %s3 = inlined_call_operand.hbm [shape: f32[32,128], index: 3, kind: output, shape index: {}]
  %s4 = sld [smem:[#allocation0]]
  $region53: #{tpu_custom_call.1} parent=0
    _
  %s6 = ssub.s32 1, %s4
  %s7 = scalar_select 0, %s6, %s4
  $region1: #{tpu_custom_call.1} parent=0
    #allocation2 [shape = 'u8[16384]{0}', space=vmem, size = 0x4000, scoped, tag = 'input window, operand 0']
    #allocation3 [shape = 's32[2]{0}', space=sflag, size = 0x8, scoped, tag = 'scoped memory for tpu_custom_call.1']
    #allocation4 [shape = 's32[2]{0}', space=sflag, size = 0x8, scoped, tag = 'scoped memory for tpu_custom_call.1']
    #allocation5 [shape = 'u8[32768]{0}', space=vmem, size = 0x8000, scoped, tag = 'input window, operand 1, single buffered']
    #allocation6 [shape = 's32[1]{0}', space=sflag, size = 0x4, scoped, tag = 'scoped memory for tpu_custom_call.1']
    #allocation7 [shape = 'u8[16384]{0}', space=vmem, size = 0x4000, scoped, tag = 'output window, operand 0']
    %8 = vsyncpa [#allocation3], 0
    %s9 = scalar_lea.sflag [#allocation3], 1
    %10 = vsyncpa %s9, 0
    %11 = vsyncpa [#allocation6], 0
    %12 = vsyncpa [#allocation4], 0
    %s13 = scalar_lea.sflag [#allocation4], 1
    %14 = vsyncpa %s13, 0
    loop: start=0, step=1, limit=4
    $region2: #{tpu_custom_call.1} parent=1 // loop_pre_header
      _
    $region3: #{tpu_custom_call.1} parent=1 // loop_header
      %s16 = sphi 0, %s20
      %p17 = scmp.ge.s32.totalorder %s16, 4
      %s26 = sphi 0, %s28
      %s29 = sphi 0, %s26
      %s30 = sphi 0, %s29
      %s46 = sphi 0, %s30
      %s50 = sphi 0, %s50
      %s52 = sphi 0, %s50
      %s53 = sphi 0, %s52
      %s67 = sphi 0, %s53
      %s71 = sphi 0, %s71
      %s73 = sphi 0, %s71
      %s74 = sphi 0, %s73
      %s88 = sphi 0, %s74
      %s94 = sphi 0, %s96
      %s97 = sphi 0, %s94
      %s98 = sphi 0, %s97
      %s114 = sphi 0, %s98
    $region4: #{tpu_custom_call.1} parent=1 // loop_header_branch
      %19 = sbr.rel (%p17) target = $region8
    $region5: #{tpu_custom_call.1} parent=1 // loop_body
      %s21 = ssub.s32 %s16, 1
      %s22 = ssub.s32 %s16, 2
      %s23 = sadd.s32 %s16, 1
      %s24 = ssub.s32 %s16, %s23
      %p25 = scmp.eq.s32.totalorder %s24, 0
      %s27 = sadd.s32 %s26, 1
      %s28 = scalar_select %p25, %s26, %s27
      %p31 = pneg %p25
      %p32 = scmp.eq.s32.totalorder %s16, 1
      %p33 = por %p31, %p32
      %p34 = scmp.ne.s32.totalorder %s26, %s29
      %p35 = scmp.eq.s32.totalorder %s16, 0
      %p36 = por %p34, %p35
      %p37 = scmp.ne.s32.totalorder %s26, %s29
      %p38 = scmp.eq.s32.totalorder %s21, 1
      %p39 = por %p37, %p38
      %p40 = scmp.ne.s32.totalorder %s29, %s30
      %p41 = scmp.eq.s32.totalorder %s21, 0
      %p42 = por %p40, %p41
      %p43 = scmp.ne.s32.totalorder %s29, %s30
      %p44 = scmp.eq.s32.totalorder %s22, 1
      %p45 = por %p43, %p44
      %p47 = scmp.ne.s32.totalorder %s30, %s46
      %p48 = scmp.eq.s32.totalorder %s22, 0
      %p49 = por %p47, %p48
      %s51 = sadd.s32 %s50, 1
      %p54 = scmp.eq.s32.totalorder %s16, 1
      %p55 = scmp.ne.s32.totalorder %s50, %s52
      %p56 = scmp.eq.s32.totalorder %s16, 0
      %p57 = por %p55, %p56
      %p58 = scmp.ne.s32.totalorder %s50, %s52
      %p59 = scmp.eq.s32.totalorder %s21, 1
      %p60 = por %p58, %p59
      %p61 = scmp.ne.s32.totalorder %s52, %s53
      %p62 = scmp.eq.s32.totalorder %s21, 0
      %p63 = por %p61, %p62
      %p64 = scmp.ne.s32.totalorder %s52, %s53
      %p65 = scmp.eq.s32.totalorder %s22, 1
      %p66 = por %p64, %p65
      %p68 = scmp.ne.s32.totalorder %s53, %s67
      %p69 = scmp.eq.s32.totalorder %s22, 0
      %p70 = por %p68, %p69
      %s72 = sadd.s32 %s71, 1
      %p75 = scmp.eq.s32.totalorder %s16, 1
      %p76 = scmp.ne.s32.totalorder %s71, %s73
      %p77 = scmp.eq.s32.totalorder %s16, 0
      %p78 = por %p76, %p77
      %p79 = scmp.ne.s32.totalorder %s71, %s73
      %p80 = scmp.eq.s32.totalorder %s21, 1
      %p81 = por %p79, %p80
      %p82 = scmp.ne.s32.totalorder %s73, %s74
      %p83 = scmp.eq.s32.totalorder %s21, 0
      %p84 = por %p82, %p83
      %p85 = scmp.ne.s32.totalorder %s73, %s74
      %p86 = scmp.eq.s32.totalorder %s22, 1
      %p87 = por %p85, %p86
      %p89 = scmp.ne.s32.totalorder %s74, %s88
      %p90 = scmp.eq.s32.totalorder %s22, 0
      %p91 = por %p89, %p90
      %s92 = ssub.s32 %s16, %s23
      %p93 = scmp.eq.s32.totalorder %s92, 0
      %s95 = sadd.s32 %s94, 1
      %s96 = scalar_select %p93, %s94, %s95
      %p99 = pneg %p93
      %p100 = scmp.eq.s32.totalorder %s16, 1
      %p101 = por %p99, %p100
      %p102 = scmp.ne.s32.totalorder %s94, %s97
      %p103 = scmp.eq.s32.totalorder %s16, 0
      %p104 = por %p102, %p103
      %p105 = scmp.ne.s32.totalorder %s94, %s97
      %p106 = scmp.eq.s32.totalorder %s21, 1
      %p107 = por %p105, %p106
      %p108 = scmp.ne.s32.totalorder %s97, %s98
      %p109 = scmp.eq.s32.totalorder %s21, 0
      %p110 = por %p108, %p109
      %p111 = scmp.ne.s32.totalorder %s97, %s98
      %p112 = scmp.eq.s32.totalorder %s22, 1
      %p113 = por %p111, %p112
      %p115 = scmp.ne.s32.totalorder %s98, %s114
      %p116 = scmp.eq.s32.totalorder %s22, 0
      %p117 = por %p115, %p116
      %p118 = scmp.le.s32.totalorder 1, %s16
      %p119 = scmp.lt.s32.totalorder %s16, 3
      %p120 = pnand %p118, %p119
      %p121 = pneg %p120
      // Predicated region
      $region9: #{tpu_custom_call.1} parent=5 // pred_check
        _
      $region10: #{tpu_custom_call.1} parent=5 // pred_check_branch
        %123 = sbr.rel (%p120) target = $region12
      $region11: #{tpu_custom_call.1} parent=5 // pred_region
        %s124 = ssub.s32 %s16, 1
        // Predicated region
        $region13: #{tpu_custom_call.1} parent=11 // pred_check
          %p125 = pneg %p63
        $region14: #{tpu_custom_call.1} parent=11 // pred_check_branch
          %127 = sbr.rel (%p125) target = $region16
        $region15: #{tpu_custom_call.1} parent=11 // pred_region
          %s129 = ssub.s32 1024, 1024
          %130 = vsyncadd [#allocation6], %s129
          %s131 = sshll.u32 [#allocation5], 4
          %s132 = int_to_ptr.vmem [resolvable:$true] %s131
          %137 = dma.hbm_to_vmem [thread:$0]  %s1, 1024, %s132, [#allocation6], 64, 64, 4
        $region16: #{tpu_custom_call.1} parent=11 // pred_fallthru
          _
        // Predicated region
        $region17: #{tpu_custom_call.1} parent=11 // pred_check
          %p138 = pneg %p84
        $region18: #{tpu_custom_call.1} parent=11 // pred_check_branch
          %140 = sbr.rel (%p138) target = $region20
        $region19: #{tpu_custom_call.1} parent=11 // pred_region
          _
        $region20: #{tpu_custom_call.1} parent=11 // pred_fallthru
          _
      $region12: #{tpu_custom_call.1} parent=5 // pred_fallthru
        _
      %p141 = scmp.lt.s32.totalorder %s16, 2
      // Predicated region
      $region21: #{tpu_custom_call.1} parent=5 // pred_check
        %p142 = pneg %p141
      $region22: #{tpu_custom_call.1} parent=5 // pred_check_branch
        %144 = sbr.rel (%p142) target = $region24
      $region23: #{tpu_custom_call.1} parent=5 // pred_region
        // Predicated region
        $region25: #{tpu_custom_call.1} parent=23 // pred_check
          %p145 = pneg %p36
        $region26: #{tpu_custom_call.1} parent=23 // pred_check_branch
          %147 = sbr.rel (%p145) target = $region28
        $region27: #{tpu_custom_call.1} parent=23 // pred_region
          %s148 = sand.u32 %s26, 1
          %s149 = scalar_lea.sflag [#allocation3], %s148
          %s150 = sand.u32 %s26, 1
          %s151 = smul.addr %s150, 16
          %s152 = scalar_lea.vmem [#allocation2], %s151
          %s153 = smul.u32 2, %s16
          %s155 = ssub.s32 256, 256
          %156 = vsyncadd %s149, %s155
          %s157 = smul.addr %s153, 128
          %s158 = scalar_lea.hbm %s0, %s157
          %s159 = sshll.u32 %s152, 4
          %s160 = int_to_ptr.vmem [resolvable:$true] %s159
          %165 = dma.hbm_to_vmem [thread:$0]  %s158, 256, %s160, %s149, 128, 128, 8
        $region28: #{tpu_custom_call.1} parent=23 // pred_fallthru
          _
      $region24: #{tpu_custom_call.1} parent=5 // pred_fallthru
        _
      %p166 = scmp.le.s32.totalorder 1, %s16
      %p167 = scmp.lt.s32.totalorder %s16, 3
      %p168 = pnand %p166, %p167
      %p169 = pneg %p168
      // Predicated region
      $region29: #{tpu_custom_call.1} parent=5 // pred_check
        _
      $region30: #{tpu_custom_call.1} parent=5 // pred_check_branch
        %171 = sbr.rel (%p168) target = $region32
      $region31: #{tpu_custom_call.1} parent=5 // pred_region
        %s172 = ssub.s32 %s16, 1
        %s173 = sand.u32 %s29, 1
        %s174 = scalar_lea.sflag [#allocation3], %s173
        %s175 = sand.u32 %s29, 1
        %s176 = smul.addr %s175, 16
        %s177 = scalar_lea.vmem [#allocation2], %s176
        // Predicated region
        $region33: #{tpu_custom_call.1} parent=31 // pred_check
          %p178 = pneg %p42
        $region34: #{tpu_custom_call.1} parent=31 // pred_check_branch
          %180 = sbr.rel (%p178) target = $region36
        $region35: #{tpu_custom_call.1} parent=31 // pred_region
          %181 = dma.done %s174, 256
        $region36: #{tpu_custom_call.1} parent=31 // pred_fallthru
          _
        // Predicated region
        $region37: #{tpu_custom_call.1} parent=31 // pred_check
          %p182 = pneg %p63
        $region38: #{tpu_custom_call.1} parent=31 // pred_check_branch
          %184 = sbr.rel (%p182) target = $region40
        $region39: #{tpu_custom_call.1} parent=31 // pred_region
          %185 = dma.done [#allocation6], 1024
        $region40: #{tpu_custom_call.1} parent=31 // pred_fallthru
          _
        %s186 = sand.u32 %s29, 1
        %s187 = scalar_lea.sflag [#allocation3], %s186
        %s188 = sand.u32 %s29, 1
        %s189 = smul.addr %s188, 16
        %s190 = scalar_lea.vmem [#allocation2], %s189
        %p191 = pneg %p42
        %p192 = pneg %p39
        %p193 = pneg %p63
        %p194 = pneg %p60
        %p195 = pneg %p84
        %p196 = pneg %p81
        %p197 = pneg %p110
        %p198 = pneg %p107
        %s199 = sand.u32 %s97, 1
        %s200 = scalar_lea.sflag [#allocation4], %s199
        %s201 = sand.u32 %s97, 1
        %s202 = smul.addr %s201, 16
        %s203 = scalar_lea.vmem [#allocation7], %s202
        %s204 = smul.u32 2, %s21
        %s205 = smul.u32 2, %s21
        %v207 = vld [vmem:[%s177] sm:$0xff]
        %v208 = vld [vmem:[%s177 + $0x8] sm:$0xff]
        %v209 = vpack.c.bf16 %v208, %v207
        %v210 = vld [vmem:[#allocation5] sm:$0xf]
        %v211 = vld [vmem:[#allocation5 + $0x4] sm:$0xf]
        %v212 = vld [vmem:[#allocation5 + $0x8] sm:$0xf]
        %v213 = vld [vmem:[#allocation5 + $0xc] sm:$0xf]
        %v214 = vld [vmem:[#allocation5 + $0x10] sm:$0xf]
        %v215 = vld [vmem:[#allocation5 + $0x14] sm:$0xf]
        %v216 = vld [vmem:[#allocation5 + $0x18] sm:$0xf]
        %v217 = vld [vmem:[#allocation5 + $0x1c] sm:$0xf]
        %v218 = vld [vmem:[#allocation5 + $0x20] sm:$0xf]
        %v219 = vld [vmem:[#allocation5 + $0x24] sm:$0xf]
        %v220 = vld [vmem:[#allocation5 + $0x28] sm:$0xf]
        %v221 = vld [vmem:[#allocation5 + $0x2c] sm:$0xf]
        %v222 = vld [vmem:[#allocation5 + $0x30] sm:$0xf]
        %v223 = vld [vmem:[#allocation5 + $0x34] sm:$0xf]
        %v224 = vld [vmem:[#allocation5 + $0x38] sm:$0xf]
        %v225 = vld [vmem:[#allocation5 + $0x3c] sm:$0xf]
        %v226 = vld [vmem:[%s2] sm:$0x1]
        %v228 = vlaneseq
        %v229 = vshrl.u32 %v228, 7
        %v230 = vsub.s32 0, %v229
        %v231 = vrot.slane %v226, %v230
        %v249 = vunpack.c.l.b16 %v210
        %v250 = vunpack.c.l.b16 %v211
        %v251 = vunpack.c.l.b16 %v212
        %v252 = vunpack.c.l.b16 %v213
        %v253 = vunpack.c.l.b16 %v214
        %v254 = vunpack.c.l.b16 %v215
        %v255 = vunpack.c.l.b16 %v216
        %v256 = vunpack.c.l.b16 %v217
        %v257 = vunpack.c.l.b16 %v218
        %v258 = vunpack.c.l.b16 %v219
        %v259 = vunpack.c.l.b16 %v220
        %v260 = vunpack.c.l.b16 %v221
        %v261 = vunpack.c.l.b16 %v222
        %v262 = vunpack.c.l.b16 %v223
        %v263 = vunpack.c.l.b16 %v224
        %v264 = vunpack.c.l.b16 %v225
        %v265 = vpack.c.b16 %v250, %v249
        %v266 = vpack.c.b16 %v252, %v251
        %v267 = vpack.c.b16 %v254, %v253
        %v268 = vpack.c.b16 %v256, %v255
        %v269 = vpack.c.b16 %v258, %v257
        %v270 = vpack.c.b16 %v260, %v259
        %v271 = vpack.c.b16 %v262, %v261
        %v272 = vpack.c.b16 %v264, %v263
        %281 = vmatprep.subr.bf16.mxu0 0
        %282 = vmatpush1.bf16.msra.mxu0 %v272
        %283 = vmatprep.subr.bf16.mxu0 0
        %284 = vmatpush1.bf16.msra.mxu0 %v271
        %285 = vmatprep.subr.bf16.mxu0 0
        %286 = vmatpush1.bf16.msra.mxu0 %v270
        %287 = vmatprep.subr.bf16.mxu0 0
        %288 = vmatpush1.bf16.msra.mxu0 %v269
        %289 = vmatprep.subr.bf16.mxu0 0
        %290 = vmatpush1.bf16.msra.mxu0 %v268
        %291 = vmatprep.subr.bf16.mxu0 0
        %292 = vmatpush1.bf16.msra.mxu0 %v267
        %293 = vmatprep.subr.bf16.mxu0 0
        %294 = vmatpush1.bf16.msra.mxu0 %v266
        %295 = vmatprep.subr.bf16.mxu0 0
        %296 = vmatpush1.bf16.msra.mxu0 %v265
        %297 = vmatprep.subr.bf16.mxu0 0
        %298 = vmatpush2.bf16.msra.mxu0 0
        %299 = vmatprep.subr.bf16.mxu0 0
        %300 = vmatpush2.bf16.msra.mxu0 0
        %301 = vmatprep.subr.bf16.mxu0 0
        %302 = vmatpush2.bf16.msra.mxu0 0
        %303 = vmatprep.subr.bf16.mxu0 0
        %304 = vmatpush2.bf16.msra.mxu0 0
        %305 = vmatprep.subr.bf16.mxu0 0
        %306 = vmatpush2.bf16.msra.mxu0 0
        %307 = vmatprep.subr.bf16.mxu0 0
        %308 = vmatpush2.bf16.msra.mxu0 0
        %309 = vmatprep.subr.bf16.mxu0 0
        %310 = vmatpush2.bf16.msra.mxu0 0
        %311 = vmatprep.subr.bf16.mxu0 0
        %312 = vmatpush2.bf16.msra.mxu0 0
        %313 = vmatprep.mubr.bf16.mxu0 0
        %314 = vmatmul.mubr.bf16.gmra.mxu0 %v209
        %v315 = vpop.f32.mrf.mxu0
        %v316 = vadd.f32 %v231, %v315
        %v317 = vpop.f32.mrf.mxu0
        %v318 = vpop.f32.mrf.mxu0
        %v319 = vadd.f32 %v231, %v318
        %v320 = vpop.f32.mrf.mxu0
        %321 = vdwg.mxu0
        %322 = vst [vmem:[%s203] sm:$0xff] %v316
        %323 = vst [vmem:[%s203 + $0x8] sm:$0xff] %v319
        %s324 = sand.u32 %s97, 1
        %s325 = scalar_lea.sflag [#allocation4], %s324
        %s326 = sand.u32 %s97, 1
        %s327 = smul.addr %s326, 16
        %s328 = scalar_lea.vmem [#allocation7], %s327
        // Predicated region
        $region41: #{tpu_custom_call.1} parent=31 // pred_check
          %p329 = pneg %p107
        $region42: #{tpu_custom_call.1} parent=31 // pred_check_branch
          %331 = sbr.rel (%p329) target = $region44
        $region43: #{tpu_custom_call.1} parent=31 // pred_region
          %s332 = smul.u32 2, %s21
          %s334 = ssub.s32 256, 256
          %335 = vsyncadd %s325, %s334
          %s336 = smul.addr %s332, 128
          %s337 = scalar_lea.hbm %s3, %s336
          %s338 = sshll.u32 %s328, 4
          %s339 = int_to_ptr.vmem [resolvable:$true] %s338
          %344 = dma.vmem_to_hbm [thread:$0]  %s339, 256, %s337, %s325, 128, 128, 8
        $region44: #{tpu_custom_call.1} parent=31 // pred_fallthru
          _
      $region32: #{tpu_custom_call.1} parent=5 // pred_fallthru
        _
      %p345 = scmp.le.s32.totalorder 2, %s16
      // Predicated region
      $region45: #{tpu_custom_call.1} parent=5 // pred_check
        %p346 = pneg %p345
      $region46: #{tpu_custom_call.1} parent=5 // pred_check_branch
        %348 = sbr.rel (%p346) target = $region48
      $region47: #{tpu_custom_call.1} parent=5 // pred_region
        %s349 = ssub.s32 %s16, 2
        // Predicated region
        $region49: #{tpu_custom_call.1} parent=47 // pred_check
          %p350 = pneg %p113
        $region50: #{tpu_custom_call.1} parent=47 // pred_check_branch
          %352 = sbr.rel (%p350) target = $region52
        $region51: #{tpu_custom_call.1} parent=47 // pred_region
          %s353 = sand.u32 %s98, 1
          %s354 = scalar_lea.sflag [#allocation4], %s353
          %s355 = sand.u32 %s98, 1
          %s356 = smul.addr %s355, 16
          %s357 = scalar_lea.vmem [#allocation7], %s356
          %358 = dma.done %s354, 256
        $region52: #{tpu_custom_call.1} parent=47 // pred_fallthru
          _
      $region48: #{tpu_custom_call.1} parent=5 // pred_fallthru
        _
    $region6: #{tpu_custom_call.1} parent=1 // loop_footer
      %s20 = sadd.s32 1, %s16
    $region7: #{tpu_custom_call.1} parent=1 // loop_footer_branch
      %15 = sbr.rel target = $region3
    $region8: #{tpu_custom_call.1} parent=1 // loop_exit
      _
    %359 = vsyncpa [#allocation3], 1
    %s360 = scalar_lea.sflag [#allocation3], 1
    %361 = vsyncpa %s360, 1
    %362 = vsyncpa [#allocation6], 1
    %363 = vsyncpa [#allocation4], 1
    %s364 = scalar_lea.sflag [#allocation4], 1
    %365 = vsyncpa %s364, 1

</llo_original>
